<compile_context>
chip_gen: v6e
topology: v6e:2x2x1
jax: 0.10.0
libtpu: 0.0.40
codegen_flags: <defaults>
</compile_context>

<pallas_src>
import jax
import jax.numpy as jnp
from jax.experimental import pallas as pl
from jax.experimental.pallas import tpu as pltpu


def mlp_kernel(x_ref, w1_ref, b1_ref, w2_ref, b2_ref, o_ref):
    """Fused 2-layer MLP for one batch tile.

    x_ref : (TB, A)   native dtype (f32/bf16), cast to f32 in VMEM
    w1_ref: (A, H)    f32, VMEM-resident across grid steps
    b1_ref: (1, H)    f32, resident
    w2_ref: (H, OUT)  f32, resident
    b2_ref: (1, OUT)  f32, resident
    o_ref : (TB, OUT) f32, natural output width (OUT = 2)
    """
    x = x_ref[...].astype(jnp.float32)
    h = jnp.dot(x, w1_ref[...], preferred_element_type=jnp.float32)
    h = jnp.maximum(h + b1_ref[...], 0.0)                       # ReLU
    y = jnp.dot(h, w2_ref[...], preferred_element_type=jnp.float32)
    y = jnp.maximum(y + b2_ref[...], 0.0)                       # ReLU
    o_ref[...] = y.astype(o_ref.dtype)


def _round_up(n, m):
    return -(-n // m) * m


def _vmem_capacity_bytes():
    try:
        return int(pltpu.get_tpu_info().vmem_capacity_bytes)
    except Exception:
        return 64 * 1024 * 1024          # conservative: v7x per-TensorCore VMEM


def _pick_batch_tile(batch, in_row_bytes, out_row_bytes, sublane,
                     vmem_budget_bytes, target_tile_bytes):
    """Rows per batch tile.

    Big enough that each x DMA is ~target_tile_bytes (streams near the HBM
    roofline), small enough that the double-buffered x + out tiles fit the
    per-generation VMEM budget, never larger than the (sublane-floored)
    batch, and -- when the batch allows it -- capped so the grid has >= 2
    steps (v7x megacore sharding of the 'parallel' batch axis).
    """
    rows_target = max(sublane, target_tile_bytes // max(in_row_bytes, 1))
    rows_vmem = max(sublane, vmem_budget_bytes // (2 * (in_row_bytes + out_row_bytes)))
    tb = min(rows_target, rows_vmem)
    tb = max(sublane, (tb // sublane) * sublane)
    tb = min(tb, (batch // sublane) * sublane)           # never exceed the array
    if batch >= 2 * sublane:                             # keep >= 2 grid steps
        tb = min(tb, _round_up((batch + 1) // 2, sublane))
    return max(sublane, tb)


@jax.jit
def net_forward(x, w1, b1, w2, b2):
    """Forward pass of Net.  x: (B, ...) -> (B, 2) f32."""
    B = x.shape[0]
    x = x.reshape(B, -1)                                 # torch's x.view(B, -1)
    if x.dtype != jnp.float32 and x.dtype != jnp.bfloat16:
        x = x.astype(jnp.float32)                        # ints etc.: one wrapper cast
    A = x.shape[1]
    H = w1.shape[1]
    OUT = w2.shape[1]

    w1 = w1.astype(jnp.float32)
    b1 = b1.reshape(1, H).astype(jnp.float32)
    w2 = w2.astype(jnp.float32)
    b2 = b2.reshape(1, OUT).astype(jnp.float32)

    itemsize = x.dtype.itemsize
    sublane = max(8, 32 // itemsize)                     # 8 for f32, 16 for bf16

    # Only a batch smaller than one sublane group gets padded (tiny copy);
    # everything else relies on the masked partial last block instead.
    B_rows = B
    if B_rows < sublane:
        x = jnp.pad(x, ((0, sublane - B_rows), (0, 0)))
        B_rows = sublane

    # Per-generation VMEM budget for the double-buffered x/out tiles:
    # ~32 MiB on 128 MiB parts (v5e/v6e), ~16 MiB on v7x (64 MiB per TC).
    vmem_cap = _vmem_capacity_bytes()
    tile_budget = min(vmem_cap // 4, 32 * 1024 * 1024)

    tb = _pick_batch_tile(
        batch=B_rows,
        in_row_bytes=A * itemsize,
        out_row_bytes=OUT * 4,
        sublane=sublane,
        vmem_budget_bytes=tile_budget,
        target_tile_bytes=2 * 1024 * 1024,               # ~2 MiB of x per step
    )
    grid = (pl.cdiv(B_rows, tb),)                        # partial last block, no jnp.pad

    weight_bytes = 4 * (A * H + H + H * OUT + OUT)
    tile_bytes = 2 * tb * (A * itemsize + OUT * 4)       # double-buffered x + out
    # TODO(synk): for extreme attr_count where even an 8-row x tile plus the
    # resident (A, 10) weights exceed VMEM, tile A as a second "arbitrary"
    # grid axis with an f32 accumulator scratch.
    vmem_limit = int(min(max(tile_bytes + 2 * weight_bytes + (8 << 20), 16 << 20),
                         vmem_cap * 3 // 4))

    out = pl.pallas_call(
        mlp_kernel,
        out_shape=jax.ShapeDtypeStruct((B_rows, OUT), jnp.float32),
        grid=grid,
        in_specs=[
            pl.BlockSpec((tb, A), lambda i: (i, 0)),     # streamed x tiles
            pl.BlockSpec((A, H), lambda i: (0, 0)),      # resident params
            pl.BlockSpec((1, H), lambda i: (0, 0)),
            pl.BlockSpec((H, OUT), lambda i: (0, 0)),
            pl.BlockSpec((1, OUT), lambda i: (0, 0)),
        ],
        out_specs=pl.BlockSpec((tb, OUT), lambda i: (i, 0)),
        compiler_params=pltpu.CompilerParams(
            dimension_semantics=("parallel",),           # megacore-shardable batch axis
            vmem_limit_bytes=vmem_limit,
        ),
        cost_estimate=pl.CostEstimate(
            flops=2 * B_rows * A * H + 2 * B_rows * H * OUT,
            transcendentals=0,
            bytes_accessed=B_rows * A * itemsize + 4 * B_rows * OUT + weight_bytes,
        ),
    )(x, w1, b1, w2, b2)

    return out[:B] if B_rows != B else out


def init_params(attr_count, key):
    """nn.Linear-style init; weights stored transposed as (in, out)."""
    k1, k2, k3, k4 = jax.random.split(key, 4)
    bound1 = 1.0 / jnp.sqrt(jnp.float32(attr_count))
    bound2 = 1.0 / jnp.sqrt(jnp.float32(10.0))
    w1 = jax.random.uniform(k1, (attr_count, 10), jnp.float32, -bound1, bound1)
    b1 = jax.random.uniform(k2, (10,), jnp.float32, -bound1, bound1)
    w2 = jax.random.uniform(k3, (10, 2), jnp.float32, -bound2, bound2)
    b2 = jax.random.uniform(k4, (2,), jnp.float32, -bound2, bound2)
    return w1, b1, w2, b2


def _reference(x, w1, b1, w2, b2):
    x2 = x.reshape(x.shape[0], -1).astype(jnp.float32)
    h = jnp.maximum(x2 @ w1 + b1.reshape(1, -1), 0.0)
    return jnp.maximum(h @ w2 + b2.reshape(1, -1), 0.0)


if __name__ == "__main__":
    key = jax.random.PRNGKey(0)
    kx1, kx2, kp = jax.random.split(key, 3)

    attr_count = 32
    w1, b1, w2, b2 = init_params(attr_count, kp)

    # Tolerance covers potential MXU bf16-pass vs f32-emulation differences
    # between the Pallas matmuls and the XLA reference matmuls.
    atol = rtol = 5e-3

    # Case 1: small batch, single grid step.
    x1 = jax.random.normal(kx1, (8, attr_count), jnp.float32)
    out1 = jax.block_until_ready(net_forward(x1, w1, b1, w2, b2))
    ref1 = _reference(x1, w1, b1, w2, b2)
    assert out1.shape == (8, 2), out1.shape
    assert jnp.allclose(out1, ref1, atol=atol, rtol=rtol)

    # Case 2: 4-D input (exercises x.view(B, -1)) with a ragged batch:
    # B=200 -> tb=104, grid=(2,), masked partial last block, resident weights.
    x2 = jax.random.normal(kx2, (200, 2, 4, 4), jnp.float32)
    out2 = jax.block_until_ready(net_forward(x2, w1, b1, w2, b2))
    ref2 = _reference(x2, w1, b1, w2, b2)
    assert out2.shape == (200, 2), out2.shape
    assert jnp.allclose(out2, ref2, atol=atol, rtol=rtol)

    print("KERNEL_OK")
</pallas_src>

<mosaic_0001>
module attributes {stable_mosaic.version = 11 : i64} {
  func.func @mlp_kernel(%arg0: i32, %arg1: memref<8x32xf32, #tpu.memory_space<vmem>>, %arg2: memref<32x10xf32, #tpu.memory_space<vmem>>, %arg3: memref<1x10xf32, #tpu.memory_space<vmem>>, %arg4: memref<10x2xf32, #tpu.memory_space<vmem>>, %arg5: memref<1x2xf32, #tpu.memory_space<vmem>>, %arg6: memref<8x2xf32, #tpu.memory_space<vmem>>) attributes {dimension_semantics = [#tpu.dimension_semantics<parallel>], iteration_bounds = array<i64: 1>, scalar_prefetch = 0 : i64, scratch_operands = 0 : i64, tpu.core_type = #tpu.core_type<tc>, window_params = [{transform_indices = @transform_0, window_bounds = array<i64: 8, 32>}, {pipeline_mode = #tpu.pipeline_mode<synchronous>, transform_indices = @transform_1, window_bounds = array<i64: 32, 10>}, {pipeline_mode = #tpu.pipeline_mode<synchronous>, transform_indices = @transform_2, window_bounds = array<i64: 1, 10>}, {pipeline_mode = #tpu.pipeline_mode<synchronous>, transform_indices = @transform_3, window_bounds = array<i64: 10, 2>}, {pipeline_mode = #tpu.pipeline_mode<synchronous>, transform_indices = @transform_4, window_bounds = array<i64: 1, 2>}, {transform_indices = @transform_5, window_bounds = array<i64: 8, 2>}]} {
    %c0 = arith.constant 0 : index
    %c0_0 = arith.constant 0 : index
    %0 = vector.load %arg1[%c0, %c0_0] : memref<8x32xf32, #tpu.memory_space<vmem>>, vector<8x32xf32>
    %c0_1 = arith.constant 0 : index
    %c0_2 = arith.constant 0 : index
    %1 = vector.load %arg2[%c0_1, %c0_2] : memref<32x10xf32, #tpu.memory_space<vmem>>, vector<32x10xf32>
    %cst = arith.constant dense<0.000000e+00> : vector<8x10xf32>
    %2 = tpu.matmul %0, %1, %cst {dimension_numbers = #tpu.dot_dimension_numbers<[1], [0], [0], [1], [0, 0, 1, 1], [], []>} : vector<8x32xf32>, vector<32x10xf32>, vector<8x10xf32> -> vector<8x10xf32>
    %c0_3 = arith.constant 0 : index
    %c0_4 = arith.constant 0 : index
    %3 = vector.load %arg3[%c0_3, %c0_4] : memref<1x10xf32, #tpu.memory_space<vmem>>, vector<1x10xf32>
    %4 = vector.broadcast %3 : vector<1x10xf32> to vector<8x10xf32>
    %5 = arith.addf %2, %4 : vector<8x10xf32>
    %cst_5 = arith.constant 0.000000e+00 : f32
    %6 = vector.broadcast %cst_5 : f32 to vector<8x10xf32>
    %7 = arith.maximumf %5, %6 : vector<8x10xf32>
    %c0_6 = arith.constant 0 : index
    %c0_7 = arith.constant 0 : index
    %8 = vector.load %arg4[%c0_6, %c0_7] : memref<10x2xf32, #tpu.memory_space<vmem>>, vector<10x2xf32>
    %cst_8 = arith.constant dense<0.000000e+00> : vector<8x2xf32>
    %9 = tpu.matmul %7, %8, %cst_8 {dimension_numbers = #tpu.dot_dimension_numbers<[1], [0], [0], [1], [0, 0, 1, 1], [], []>} : vector<8x10xf32>, vector<10x2xf32>, vector<8x2xf32> -> vector<8x2xf32>
    %c0_9 = arith.constant 0 : index
    %c0_10 = arith.constant 0 : index
    %10 = vector.load %arg5[%c0_9, %c0_10] : memref<1x2xf32, #tpu.memory_space<vmem>>, vector<1x2xf32>
    %11 = vector.broadcast %10 : vector<1x2xf32> to vector<8x2xf32>
    %12 = arith.addf %9, %11 : vector<8x2xf32>
    %cst_11 = arith.constant 0.000000e+00 : f32
    %13 = vector.broadcast %cst_11 : f32 to vector<8x2xf32>
    %14 = arith.maximumf %12, %13 : vector<8x2xf32>
    %c0_12 = arith.constant 0 : index
    %c0_13 = arith.constant 0 : index
    %15 = vector.load %arg6[%c0_12, %c0_13] : memref<8x2xf32, #tpu.memory_space<vmem>>, vector<8x2xf32>
    tpu.vector_store %arg6[%c0_12, %c0_13], %14 {strides = array<i32>} : memref<8x2xf32, #tpu.memory_space<vmem>>, vector<8x2xf32>,
    return
  }
  func.func @transform_0(%arg0: i32) -> (i32, i32) {
    %c0_i32 = arith.constant 0 : i32
    %c0_i32_0 = arith.constant 0 : i32
    return %arg0, %c0_i32 : i32, i32
  }
  func.func @transform_1(%arg0: i32) -> (i32, i32) {
    %c0_i32 = arith.constant 0 : i32
    %c0_i32_0 = arith.constant 0 : i32
    %c0_i32_1 = arith.constant 0 : i32
    return %c0_i32, %c0_i32_0 : i32, i32
  }
  func.func @transform_2(%arg0: i32) -> (i32, i32) {
    %c0_i32 = arith.constant 0 : i32
    %c0_i32_0 = arith.constant 0 : i32
    %c0_i32_1 = arith.constant 0 : i32
    return %c0_i32, %c0_i32_0 : i32, i32
  }
  func.func @transform_3(%arg0: i32) -> (i32, i32) {
    %c0_i32 = arith.constant 0 : i32
    %c0_i32_0 = arith.constant 0 : i32
    %c0_i32_1 = arith.constant 0 : i32
    return %c0_i32, %c0_i32_0 : i32, i32
  }
  func.func @transform_4(%arg0: i32) -> (i32, i32) {
    %c0_i32 = arith.constant 0 : i32
    %c0_i32_0 = arith.constant 0 : i32
    %c0_i32_1 = arith.constant 0 : i32
    return %c0_i32, %c0_i32_0 : i32, i32
  }
  func.func @transform_5(%arg0: i32) -> (i32, i32) {
    %c0_i32 = arith.constant 0 : i32
    %c0_i32_0 = arith.constant 0 : i32
    return %arg0, %c0_i32 : i32, i32
  }
}

</mosaic_0001>

<llo_original>
// kernel: net_forward.1
$region0: #{net_forward.1}
  #allocation0 [shape = 'u32[]', space=smem, size = 0x4, offset = 0x4, fixed_abs, tag = 'smem constant byte address 0x4 - core index']
  #allocation1 [shape = 'u32[144,128]{1,0:T(1,128)}', space=vmem, size = 0x12000, scoped, tag = 'internal scratch']
  %s0 = inlined_call_operand.vmem [shape: f32[8,32], index: 0, kind: input, shape index: {}]
  %s1 = inlined_call_operand.vmem [shape: f32[32,10], index: 1, kind: input, shape index: {}]
  %s2 = inlined_call_operand.vmem [shape: f32[1,10], index: 2, kind: input, shape index: {}]
  %s3 = inlined_call_operand.vmem [shape: f32[10,2], index: 3, kind: input, shape index: {}]
  %s4 = inlined_call_operand.vmem [shape: f32[1,2], index: 4, kind: input, shape index: {}]
  %s5 = inlined_call_operand.vmem [shape: f32[8,2], index: 5, kind: output, shape index: {}]
  %s6 = sld [smem:[#allocation0]]
  $region30: #{net_forward.1} parent=0
    _
  %s8 = ssub.s32 1, %s6
  %s9 = scalar_select 0, %s8, %s6
  // Predicated region
  $region2: #{net_forward.1} parent=0 // pred_check
    _
  $region3: #{net_forward.1} parent=0 // pred_check_branch
    %11 = sbr.rel (0) target = $region5
  $region4: #{net_forward.1} parent=0 // pred_region
    _
  $region5: #{net_forward.1} parent=0 // pred_fallthru
    _
  // Predicated region
  $region6: #{net_forward.1} parent=0 // pred_check
    _
  $region7: #{net_forward.1} parent=0 // pred_check_branch
    %13 = sbr.rel (0) target = $region9
  $region8: #{net_forward.1} parent=0 // pred_region
    _
  $region9: #{net_forward.1} parent=0 // pred_fallthru
    _
  // Predicated region
  $region10: #{net_forward.1} parent=0 // pred_check
    _
  $region11: #{net_forward.1} parent=0 // pred_check_branch
    %15 = sbr.rel (0) target = $region13
  $region12: #{net_forward.1} parent=0 // pred_region
    _
  $region13: #{net_forward.1} parent=0 // pred_fallthru
    _
  // Predicated region
  $region14: #{net_forward.1} parent=0 // pred_check
    _
  $region15: #{net_forward.1} parent=0 // pred_check_branch
    %17 = sbr.rel (0) target = $region17
  $region16: #{net_forward.1} parent=0 // pred_region
    _
  $region17: #{net_forward.1} parent=0 // pred_fallthru
    _
  // Predicated region
  $region18: #{net_forward.1} parent=0 // pred_check
    _
  $region19: #{net_forward.1} parent=0 // pred_check_branch
    %19 = sbr.rel (0) target = $region21
  $region20: #{net_forward.1} parent=0 // pred_region
    _
  $region21: #{net_forward.1} parent=0 // pred_fallthru
    _
  %v20 = vld [vmem:[%s0] sm:$0xff]
  %v21 = vld [vmem:[%s1] sm:$0xff]
  %v22 = vld [vmem:[%s1 + $0x8] sm:$0xff]
  %v23 = vld [vmem:[%s1 + $0x10] sm:$0xff]
  %v24 = vld [vmem:[%s1 + $0x18] sm:$0xff]
  %v25 = vld [vmem:[%s2] sm:$0x1]
  %v27 = vlaneseq
  %v28 = vshrl.u32 %v27, 7
  %v29 = vsub.s32 0, %v28
  %v30 = vrot.slane %v25, %v29
  %vm32 = vcmask 261120
  %v34 = vsel %vm32, %v20, 0
  %36 = vmatprep.subr.mxu0 0.0
  %37 = vmatpush1.msra.mxu0 0.0
  %38 = vmatprep.subr.mxu0 0.0
  %39 = vmatpush1.msra.mxu0 0.0
  %40 = vmatprep.subr.mxu0 0.0
  %41 = vmatpush1.msra.mxu0 0.0
  %42 = vmatprep.subr.mxu0 0.0
  %43 = vmatpush1.msra.mxu0 0.0
  %44 = vmatprep.subr.mxu0 0.0
  %45 = vmatpush1.msra.mxu0 0.0
  %46 = vmatprep.subr.mxu0 0.0
  %47 = vmatpush1.msra.mxu0 0.0
  %48 = vmatprep.subr.mxu0 0.0
  %49 = vmatpush1.msra.mxu0 0.0
  %50 = vmatprep.subr.mxu0 0.0
  %51 = vmatpush1.msra.mxu0 0.0
  %52 = vmatprep.subr.mxu0 0.0
  %53 = vmatpush1.msra.mxu0 0.0
  %54 = vmatprep.subr.mxu0 0.0
  %55 = vmatpush1.msra.mxu0 0.0
  %56 = vmatprep.subr.mxu0 0.0
  %57 = vmatpush1.msra.mxu0 0.0
  %58 = vmatprep.subr.mxu0 0.0
  %59 = vmatpush1.msra.mxu0 0.0
  %60 = vmatprep.subr.mxu0 0.0
  %61 = vmatpush1.msra.mxu0 %v24
  %62 = vmatprep.subr.mxu0 0.0
  %63 = vmatpush1.msra.mxu0 %v23
  %64 = vmatprep.subr.mxu0 0.0
  %65 = vmatpush1.msra.mxu0 %v22
  %66 = vmatprep.subr.mxu0 0.0
  %67 = vmatpush1.msra.mxu0 %v21
  %68 = vmatprep.subr.mxu0 0.0
  %69 = vmatpush2.msra.mxu0 0.0
  %70 = vmatprep.subr.mxu0 0.0
  %71 = vmatpush2.msra.mxu0 0.0
  %72 = vmatprep.subr.mxu0 0.0
  %73 = vmatpush2.msra.mxu0 0.0
  %74 = vmatprep.subr.mxu0 0.0
  %75 = vmatpush2.msra.mxu0 0.0
  %76 = vmatprep.subr.mxu0 0.0
  %77 = vmatpush2.msra.mxu0 0.0
  %78 = vmatprep.subr.mxu0 0.0
  %79 = vmatpush2.msra.mxu0 0.0
  %80 = vmatprep.subr.mxu0 0.0
  %81 = vmatpush2.msra.mxu0 0.0
  %82 = vmatprep.subr.mxu0 0.0
  %83 = vmatpush2.msra.mxu0 0.0
  %84 = vmatprep.subr.mxu0 0.0
  %85 = vmatpush2.msra.mxu0 0.0
  %86 = vmatprep.subr.mxu0 0.0
  %87 = vmatpush2.msra.mxu0 0.0
  %88 = vmatprep.subr.mxu0 0.0
  %89 = vmatpush2.msra.mxu0 0.0
  %90 = vmatprep.subr.mxu0 0.0
  %91 = vmatpush2.msra.mxu0 0.0
  %92 = vmatprep.subr.mxu0 0.0
  %93 = vmatpush2.msra.mxu0 0.0
  %94 = vmatprep.subr.mxu0 0.0
  %95 = vmatpush2.msra.mxu0 0.0
  %96 = vmatprep.subr.mxu0 0.0
  %97 = vmatpush2.msra.mxu0 0.0
  %98 = vmatprep.subr.mxu0 0.0
  %99 = vmatpush2.msra.mxu0 0.0
  %100 = vmatprep.mubr.f32.mxu0 0.0
  %101 = vmatmul.mubr.f32.gmra.mxu0 %v34
  %v102 = vpop.f32.mrf.mxu0
  %v103 = vadd.f32 %v30, %v102
  %v104 = vpop.f32.mrf.mxu0
  %105 = vdwg.mxu0
  %v106 = vmax.f32 %v103, 0.0
  %v107 = vld [vmem:[%s3] sm:$0xff]
  %v108 = vld [vmem:[%s3 + $0x8] sm:$0x3]
  %v109 = vld [vmem:[%s4] sm:$0x1]
  %v111 = vlaneseq
  %v112 = vshrl.u32 %v111, 7
  %v113 = vsub.s32 0, %v112
  %v114 = vrot.slane %v109, %v113
  %vm116 = vcmask 80896
  %v118 = vsel %vm116, %v106, 0
  %vm120 = vcmask 1041408
  %v122 = vsel %vm120, %v108, 0
  %124 = vmatprep.subr.mxu0 0.0
  %125 = vmatpush1.msra.mxu0 0.0
  %126 = vmatprep.subr.mxu0 0.0
  %127 = vmatpush1.msra.mxu0 0.0
  %128 = vmatprep.subr.mxu0 0.0
  %129 = vmatpush1.msra.mxu0 0.0
  %130 = vmatprep.subr.mxu0 0.0
  %131 = vmatpush1.msra.mxu0 0.0
  %132 = vmatprep.subr.mxu0 0.0
  %133 = vmatpush1.msra.mxu0 0.0
  %134 = vmatprep.subr.mxu0 0.0
  %135 = vmatpush1.msra.mxu0 0.0
  %136 = vmatprep.subr.mxu0 0.0
  %137 = vmatpush1.msra.mxu0 0.0
  %138 = vmatprep.subr.mxu0 0.0
  %139 = vmatpush1.msra.mxu0 0.0
  %140 = vmatprep.subr.mxu0 0.0
  %141 = vmatpush1.msra.mxu0 0.0
  %142 = vmatprep.subr.mxu0 0.0
  %143 = vmatpush1.msra.mxu0 0.0
  %144 = vmatprep.subr.mxu0 0.0
  %145 = vmatpush1.msra.mxu0 0.0
  %146 = vmatprep.subr.mxu0 0.0
  %147 = vmatpush1.msra.mxu0 0.0
  %148 = vmatprep.subr.mxu0 0.0
  %149 = vmatpush1.msra.mxu0 0.0
  %150 = vmatprep.subr.mxu0 0.0
  %151 = vmatpush1.msra.mxu0 0.0
  %152 = vmatprep.subr.mxu0 0.0
  %153 = vmatpush1.msra.mxu0 %v122
  %154 = vmatprep.subr.mxu0 0.0
  %155 = vmatpush1.msra.mxu0 %v107
  %156 = vmatprep.subr.mxu0 0.0
  %157 = vmatpush2.msra.mxu0 0.0
  %158 = vmatprep.subr.mxu0 0.0
  %159 = vmatpush2.msra.mxu0 0.0
  %160 = vmatprep.subr.mxu0 0.0
  %161 = vmatpush2.msra.mxu0 0.0
  %162 = vmatprep.subr.mxu0 0.0
  %163 = vmatpush2.msra.mxu0 0.0
  %164 = vmatprep.subr.mxu0 0.0
  %165 = vmatpush2.msra.mxu0 0.0
  %166 = vmatprep.subr.mxu0 0.0
  %167 = vmatpush2.msra.mxu0 0.0
  %168 = vmatprep.subr.mxu0 0.0
  %169 = vmatpush2.msra.mxu0 0.0
  %170 = vmatprep.subr.mxu0 0.0
  %171 = vmatpush2.msra.mxu0 0.0
  %172 = vmatprep.subr.mxu0 0.0
  %173 = vmatpush2.msra.mxu0 0.0
  %174 = vmatprep.subr.mxu0 0.0
  %175 = vmatpush2.msra.mxu0 0.0
  %176 = vmatprep.subr.mxu0 0.0
  %177 = vmatpush2.msra.mxu0 0.0
  %178 = vmatprep.subr.mxu0 0.0
  %179 = vmatpush2.msra.mxu0 0.0
  %180 = vmatprep.subr.mxu0 0.0
  %181 = vmatpush2.msra.mxu0 0.0
  %182 = vmatprep.subr.mxu0 0.0
  %183 = vmatpush2.msra.mxu0 0.0
  %184 = vmatprep.subr.mxu0 0.0
  %185 = vmatpush2.msra.mxu0 0.0
  %186 = vmatprep.subr.mxu0 0.0
  %187 = vmatpush2.msra.mxu0 0.0
  %188 = vmatprep.mubr.f32.mxu0 0.0
  %189 = vmatmul.mubr.f32.gmra.mxu0 %v118
  %v190 = vpop.f32.mrf.mxu0
  %v191 = vadd.f32 %v114, %v190
  %v192 = vpop.f32.mrf.mxu0
  %193 = vdwg.mxu0
  %v194 = vmax.f32 %v191, 0.0
  %vm195 = vcmask 15360
  %196 = vst.msk [vmem:[%s5] sm:$0xff] %vm195, %v194
  // Predicated region
  $region22: #{net_forward.1} parent=0 // pred_check
    _
  $region23: #{net_forward.1} parent=0 // pred_check_branch
    %198 = sbr.rel (0) target = $region25
  $region24: #{net_forward.1} parent=0 // pred_region
    _
  $region25: #{net_forward.1} parent=0 // pred_fallthru
    _
  // Predicated region
  $region26: #{net_forward.1} parent=0 // pred_check
    _
  $region27: #{net_forward.1} parent=0 // pred_check_branch
    %200 = sbr.rel (0) target = $region29
  $region28: #{net_forward.1} parent=0 // pred_region
    _
  $region29: #{net_forward.1} parent=0 // pred_fallthru
    _

</llo_original>
